<compile_context>
chip_gen: v6e
topology: v6e:2x2x1
jax: 0.10.0
libtpu: 0.0.40
codegen_flags: <defaults>
</compile_context>

<pallas_src>
import functools

import jax
import jax.numpy as jnp
from jax.experimental import pallas as pl
from jax.experimental.pallas import tpu as pltpu

_LANE = 128
_SUBLANE = 8


def _round_up(n, m):
    return (n + m - 1) // m * m


def _cdiv(a, b):
    return (a + b - 1) // b


def _pad_2d(a, rows, cols):
    r, c = a.shape
    if r == rows and c == cols:
        return a
    return jnp.pad(a, ((0, rows - r), (0, cols - c)))


def _vmem_capacity_bytes():
    try:
        info = pltpu.get_tpu_info()
        return int(getattr(info, "vmem_capacity_bytes", 64 << 20))
    except Exception:
        return 64 << 20  # conservative (v7x per-TC) fallback


def _vmem_limit_bytes():
    # ~15% headroom: ~108 MiB on v5e/v6e (128 MiB physical), ~54 MiB on v7x.
    return int(min(int(_vmem_capacity_bytes() * 0.85), 110 << 20))


def _pick_batch_tile_resident(b_rows, d_pad, h_pad, c_pad, op_item, out_item,
                              budget):
    """Largest sublane-aligned batch tile for the resident-weight path.

    Returns None if the (single-buffered) weights do not fit the budget.
    """
    # W0/W1/b0/b1 use pl.Buffered(1) (constant index_map) -> single-buffered.
    resident = (d_pad * h_pad + h_pad * c_pad + h_pad + c_pad) * op_item
    # Per batch row: double-buffered x/out tiles + f32 h/o intermediates.
    per_row = 2 * d_pad * op_item + 2 * c_pad * out_item + 4 * (h_pad + c_pad)
    avail = budget - resident
    if avail < per_row * _SUBLANE:
        return None
    tb = max(_SUBLANE, min(1024, (avail // per_row) // _SUBLANE * _SUBLANE))
    return int(min(tb, _round_up(b_rows, _SUBLANE)))


def _pick_stream_tiles(b_rows, d_pad, h_pad, c_pad, op_item, out_item, budget):
    """(batch tile, hidden tile) for the hidden-dim streaming path."""
    for tb in (512, 256, 128, 64, 32, 16, _SUBLANE):
        tb_eff = min(tb, _round_up(b_rows, _SUBLANE))
        for th in (2048, 1024, 512, 256, _LANE):
            th_eff = min(th, _round_up(h_pad, _LANE))
            need = (2 * tb_eff * d_pad * op_item          # x (double-buffered)
                    + 2 * d_pad * th_eff * op_item        # W0 column tiles
                    + 2 * th_eff * c_pad * op_item        # W1 row tiles
                    + 2 * th_eff * 4                      # b0 tiles
                    + c_pad * 4                           # b1 (single-buffered)
                    + 2 * tb_eff * c_pad * out_item       # out (double-buffered)
                    + 4 * tb_eff * c_pad                  # f32 accumulator
                    + 4 * tb_eff * (th_eff + c_pad))      # f32 intermediates
            if need <= budget:
                return int(tb_eff), int(th_eff)
    return _SUBLANE, _LANE


def _balance_grid(b_rows, tb):
    """Ensure >=2 (preferably even) batch-grid steps so both v7x TCs get work."""
    tb = min(tb, _round_up(b_rows, _SUBLANE))
    if tb >= b_rows and b_rows >= 2 * _SUBLANE:
        tb = _round_up(_cdiv(b_rows, 2), _SUBLANE)
    nsteps = _cdiv(b_rows, tb)
    if nsteps > 1 and nsteps % 2 == 1:
        tb_even = _round_up(_cdiv(b_rows, nsteps + 1), _SUBLANE)
        if _cdiv(b_rows, tb_even) % 2 == 0:
            tb = tb_even
    return int(tb)


def _cost(b_pad, d_pad, h_tot, c_pad, op_item, out_item):
    return pl.CostEstimate(
        flops=2 * b_pad * (d_pad * h_tot + h_tot * c_pad),
        transcendentals=b_pad * h_tot,   # one tanh per hidden element
        bytes_accessed=(b_pad * d_pad + d_pad * h_tot + h_tot * c_pad
                        + h_tot + c_pad) * op_item + b_pad * c_pad * out_item,
    )


def _sigmoid_f32(h):
    # sigmoid(h) = 0.5*(tanh(h/2)+1): single EUP op; mul/add ride idle VPU slots.
    return 0.5 * (jnp.tanh(0.5 * h) + 1.0)


def _ffnn_resident_kernel(x_ref, w0_ref, b0_ref, w1_ref, b1_ref, out_ref):
    """out = sigmoid(x @ W0 + b0) @ W1 + b1 for one (TB, D_in) batch tile."""
    h = jnp.dot(x_ref[...], w0_ref[...], preferred_element_type=jnp.float32)
    h = _sigmoid_f32(h + b0_ref[...].astype(jnp.float32))
    o = jnp.dot(h.astype(w1_ref.dtype), w1_ref[...],
                preferred_element_type=jnp.float32)
    o = o + b1_ref[...].astype(jnp.float32)
    # TODO(synk): nn.Dropout(p>0) in training mode needs pltpu.prng_random_bits
    # masking; with p=0 / eval mode it is the identity.
    out_ref[...] = o.astype(out_ref.dtype)


def _ffnn_stream_kernel(x_ref, w0_ref, b0_ref, w1_ref, b1_ref, out_ref,
                        acc_ref):
    """Streams W0 columns / W1 rows over a hidden-dim reduction grid axis."""
    j = pl.program_id(1)

    @pl.when(j == 0)
    def _():
        acc_ref[...] = jnp.zeros_like(acc_ref)

    h = jnp.dot(x_ref[...], w0_ref[...], preferred_element_type=jnp.float32)
    h = _sigmoid_f32(h + b0_ref[...].astype(jnp.float32))
    acc_ref[...] += jnp.dot(h.astype(w1_ref.dtype), w1_ref[...],
                            preferred_element_type=jnp.float32)

    @pl.when(j == pl.num_programs(1) - 1)
    def _():
        out_ref[...] = (acc_ref[...]
                        + b1_ref[...].astype(jnp.float32)).astype(out_ref.dtype)


@functools.partial(jax.jit,
                   static_argnames=("cast_matmul_to_bf16", "force_stream"))
def feed_forward_nn(x, w0, b0, w1, b1, cast_matmul_to_bf16=True,
                    force_stream=False):
    """x: (B, D_in); w0: (D_in, H); b0: (H,); w1: (H, C); b1: (C,).

    Weights are stored pre-transposed as (in_features, out_features) so both
    matmuls are plain row-major MXU ops (lane dim = out_features).
    """
    B, D = x.shape
    H = w0.shape[1]
    C = w1.shape[1]
    out_dtype = x.dtype

    # MXU is bf16-native on v5e/v6e/v7x: feed bf16 operands with f32
    # accumulation unless exact-f32 matmuls were requested.
    op_dtype = x.dtype
    if cast_matmul_to_bf16 and x.dtype == jnp.float32:
        op_dtype = jnp.bfloat16

    d_pad = _round_up(D, _LANE)
    h_pad = _round_up(H, _LANE)
    c_pad = _round_up(C, _LANE)

    op_item = jnp.dtype(op_dtype).itemsize
    out_item = jnp.dtype(out_dtype).itemsize
    vmem_limit = _vmem_limit_bytes()
    budget = int(vmem_limit * 0.85)

    b_rows = _round_up(B, _SUBLANE)
    tb_res = _pick_batch_tile_resident(b_rows, d_pad, h_pad, c_pad,
                                       op_item, out_item, budget)
    use_stream = force_stream or tb_res is None

    compiler_kw = dict(vmem_limit_bytes=int(vmem_limit))

    if not use_stream:
        # ---------------- Resident-weight path ----------------
        tb = _balance_grid(b_rows, tb_res)
        b_pad = _round_up(b_rows, tb)

        # Zero padding keeps the math exact:
        #  - padded D columns of x hit zero rows of W0                 -> add 0
        #  - padded H units are sigmoid(0)=0.5 but hit zero rows of W1 -> add 0
        #  - padded C columns / batch rows are sliced off below.
        xp = _pad_2d(x.astype(op_dtype), b_pad, d_pad)
        w0p = _pad_2d(w0.astype(op_dtype), d_pad, h_pad)
        w1p = _pad_2d(w1.astype(op_dtype), h_pad, c_pad)
        b0p = _pad_2d(b0.reshape(1, H), 1, h_pad)
        b1p = _pad_2d(b1.reshape(1, C), 1, c_pad)

        out_p = pl.pallas_call(
            _ffnn_resident_kernel,
            out_shape=jax.ShapeDtypeStruct((b_pad, c_pad), out_dtype),
            grid_spec=pltpu.PrefetchScalarGridSpec(
                num_scalar_prefetch=0,
                grid=(b_pad // tb,),
                in_specs=[
                    pl.BlockSpec((tb, d_pad), lambda i: (i, 0)),      # x tile
                    pl.BlockSpec((d_pad, h_pad), lambda i: (0, 0),    # W0
                                 pipeline_mode=pl.Buffered(1)),
                    pl.BlockSpec((1, h_pad), lambda i: (0, 0),        # b0
                                 pipeline_mode=pl.Buffered(1)),
                    pl.BlockSpec((h_pad, c_pad), lambda i: (0, 0),    # W1
                                 pipeline_mode=pl.Buffered(1)),
                    pl.BlockSpec((1, c_pad), lambda i: (0, 0),        # b1
                                 pipeline_mode=pl.Buffered(1)),
                ],
                out_specs=pl.BlockSpec((tb, c_pad), lambda i: (i, 0)),
            ),
            compiler_params=pltpu.CompilerParams(
                dimension_semantics=("parallel",), **compiler_kw),
            cost_estimate=_cost(b_pad, d_pad, h_pad, c_pad, op_item, out_item),
        )(xp, w0p, b0p, w1p, b1p)
    else:
        # ---------------- Hidden-dim streaming path ----------------
        tb, th = _pick_stream_tiles(b_rows, d_pad, h_pad, c_pad,
                                    op_item, out_item, budget)
        if force_stream:
            th = _LANE          # small shapes: force a multi-step reduction
        tb = _balance_grid(b_rows, tb)
        b_pad = _round_up(b_rows, tb)
        h_tot = _round_up(h_pad, th)

        xp = _pad_2d(x.astype(op_dtype), b_pad, d_pad)
        w0p = _pad_2d(w0.astype(op_dtype), d_pad, h_tot)
        w1p = _pad_2d(w1.astype(op_dtype), h_tot, c_pad)
        b0p = _pad_2d(b0.reshape(1, H), 1, h_tot)
        b1p = _pad_2d(b1.reshape(1, C), 1, c_pad)

        # TODO(synk): extremely large input_size would additionally need a
        # D_in-axis reduction grid for the first matmul.
        out_p = pl.pallas_call(
            _ffnn_stream_kernel,
            out_shape=jax.ShapeDtypeStruct((b_pad, c_pad), out_dtype),
            grid_spec=pltpu.PrefetchScalarGridSpec(
                num_scalar_prefetch=0,
                grid=(b_pad // tb, h_tot // th),
                in_specs=[
                    pl.BlockSpec((tb, d_pad), lambda i, j: (i, 0)),   # x tile
                    pl.BlockSpec((d_pad, th), lambda i, j: (0, j)),   # W0 cols
                    pl.BlockSpec((1, th), lambda i, j: (0, j)),       # b0 slab
                    pl.BlockSpec((th, c_pad), lambda i, j: (j, 0)),   # W1 rows
                    pl.BlockSpec((1, c_pad), lambda i, j: (0, 0),     # b1
                                 pipeline_mode=pl.Buffered(1)),
                ],
                out_specs=pl.BlockSpec((tb, c_pad), lambda i, j: (i, 0)),
                scratch_shapes=[pltpu.VMEM((tb, c_pad), jnp.float32)],
            ),
            compiler_params=pltpu.CompilerParams(
                dimension_semantics=("parallel", "arbitrary"), **compiler_kw),
            cost_estimate=_cost(b_pad, d_pad, h_tot, c_pad, op_item, out_item),
        )(xp, w0p, b0p, w1p, b1p)

    return out_p[:B, :C]


def init_params(key, input_size, hidden_size, n_classes, dtype=jnp.float32):
    """Deterministic init mimicking nn.Linear's U(-1/sqrt(fan_in), 1/sqrt(fan_in)).

    Weights are returned already transposed to (in_features, out_features).
    """
    k0w, k0b, k1w, k1b = jax.random.split(key, 4)
    bound0 = 1.0 / jnp.sqrt(input_size)
    bound1 = 1.0 / jnp.sqrt(hidden_size)
    w0 = jax.random.uniform(k0w, (input_size, hidden_size), dtype,
                            minval=-bound0, maxval=bound0)
    b0 = jax.random.uniform(k0b, (hidden_size,), dtype,
                            minval=-bound0, maxval=bound0)
    w1 = jax.random.uniform(k1w, (hidden_size, n_classes), dtype,
                            minval=-bound1, maxval=bound1)
    b1 = jax.random.uniform(k1b, (n_classes,), dtype,
                            minval=-bound1, maxval=bound1)
    return w0, b0, w1, b1


if __name__ == "__main__":
    # Small shapes consistent with the module: x is (batch, input_size).
    batch, input_size, hidden_size, n_classes = 32, 48, 320, 10

    key = jax.random.PRNGKey(0)
    kx, kp = jax.random.split(key)
    x = jax.random.normal(kx, (batch, input_size), dtype=jnp.float32)
    w0, b0, w1, b1 = init_params(kp, input_size, hidden_size, n_classes)

    # Pure-JAX reference (exact sigmoid, highest-precision matmuls).
    hi = jax.lax.Precision.HIGHEST
    ref = jax.nn.sigmoid(jnp.dot(x, w0, precision=hi) + b0)
    ref = jnp.dot(ref, w1, precision=hi) + b1

    # 1) Exact-f32 matmul path (resident weights).
    out_f32 = jax.block_until_ready(
        feed_forward_nn(x, w0, b0, w1, b1, cast_matmul_to_bf16=False))
    assert out_f32.shape == (batch, n_classes)
    assert jnp.allclose(out_f32, ref, atol=5e-3, rtol=1e-3), float(
        jnp.max(jnp.abs(out_f32 - ref)))

    # 2) Default fast path: bf16 MXU operands, f32 accumulation.
    out_fast = jax.block_until_ready(feed_forward_nn(x, w0, b0, w1, b1))
    assert out_fast.shape == (batch, n_classes)
    assert jnp.allclose(out_fast, ref, atol=3e-2, rtol=2e-2), float(
        jnp.max(jnp.abs(out_fast - ref)))

    # 3) Hidden-dim streaming path (used when weights exceed the VMEM budget).
    out_stream = jax.block_until_ready(
        feed_forward_nn(x, w0, b0, w1, b1, force_stream=True))
    assert jnp.allclose(out_stream, ref, atol=3e-2, rtol=2e-2), float(
        jnp.max(jnp.abs(out_stream - ref)))

    # 4) bf16-input smoke run: operands stay bf16 on the MXU, accumulation f32.
    xb = x.astype(jnp.bfloat16)
    w0b, b0b, w1b, b1b = (p.astype(jnp.bfloat16) for p in (w0, b0, w1, b1))
    out_b = jax.block_until_ready(feed_forward_nn(xb, w0b, b0b, w1b, b1b))
    assert out_b.shape == (batch, n_classes)
    assert jnp.allclose(out_b.astype(jnp.float32), ref, atol=1e-1, rtol=1e-1)

    print("KERNEL_OK")
</pallas_src>

<mosaic_0001>
module attributes {stable_mosaic.version = 11 : i64} {
  func.func @_ffnn_resident_kernel(%arg0: i32, %arg1: memref<16x128xf32, #tpu.memory_space<vmem>>, %arg2: memref<128x384xf32, #tpu.memory_space<vmem>>, %arg3: memref<1x384xf32, #tpu.memory_space<vmem>>, %arg4: memref<384x128xf32, #tpu.memory_space<vmem>>, %arg5: memref<1x128xf32, #tpu.memory_space<vmem>>, %arg6: memref<16x128xf32, #tpu.memory_space<vmem>>) attributes {dimension_semantics = [#tpu.dimension_semantics<parallel>], iteration_bounds = array<i64: 2>, scalar_prefetch = 0 : i64, scratch_operands = 0 : i64, tpu.core_type = #tpu.core_type<tc>, window_params = [{transform_indices = @transform_0, window_bounds = array<i64: 16, 128>}, {pipeline_mode = #tpu.pipeline_mode<synchronous>, transform_indices = @transform_1, window_bounds = array<i64: 128, 384>}, {pipeline_mode = #tpu.pipeline_mode<synchronous>, transform_indices = @transform_2, window_bounds = array<i64: 1, 384>}, {pipeline_mode = #tpu.pipeline_mode<synchronous>, transform_indices = @transform_3, window_bounds = array<i64: 384, 128>}, {pipeline_mode = #tpu.pipeline_mode<synchronous>, transform_indices = @transform_4, window_bounds = array<i64: 1, 128>}, {transform_indices = @transform_5, window_bounds = array<i64: 16, 128>}]} {
    %c0 = arith.constant 0 : index
    %c0_0 = arith.constant 0 : index
    %0 = vector.load %arg1[%c0, %c0_0] : memref<16x128xf32, #tpu.memory_space<vmem>>, vector<16x128xf32>
    %c0_1 = arith.constant 0 : index
    %c0_2 = arith.constant 0 : index
    %1 = vector.load %arg2[%c0_1, %c0_2] : memref<128x384xf32, #tpu.memory_space<vmem>>, vector<128x384xf32>
    %cst = arith.constant dense<0.000000e+00> : vector<16x384xf32>
    %2 = tpu.matmul %0, %1, %cst {dimension_numbers = #tpu.dot_dimension_numbers<[1], [0], [0], [1], [0, 0, 1, 1], [], []>} : vector<16x128xf32>, vector<128x384xf32>, vector<16x384xf32> -> vector<16x384xf32>
    %c0_3 = arith.constant 0 : index
    %c0_4 = arith.constant 0 : index
    %3 = vector.load %arg3[%c0_3, %c0_4] : memref<1x384xf32, #tpu.memory_space<vmem>>, vector<1x384xf32>
    %4 = vector.broadcast %3 : vector<1x384xf32> to vector<16x384xf32>
    %5 = arith.addf %2, %4 : vector<16x384xf32>
    %cst_5 = arith.constant 5.000000e-01 : f32
    %6 = vector.broadcast %cst_5 : f32 to vector<16x384xf32>
    %7 = arith.mulf %6, %5 : vector<16x384xf32>
    %8 = math.tanh %7 : vector<16x384xf32>
    %cst_6 = arith.constant 1.000000e+00 : f32
    %9 = vector.broadcast %cst_6 : f32 to vector<16x384xf32>
    %10 = arith.addf %8, %9 : vector<16x384xf32>
    %cst_7 = arith.constant 5.000000e-01 : f32
    %11 = vector.broadcast %cst_7 : f32 to vector<16x384xf32>
    %12 = arith.mulf %11, %10 : vector<16x384xf32>
    %c0_8 = arith.constant 0 : index
    %c0_9 = arith.constant 0 : index
    %13 = vector.load %arg4[%c0_8, %c0_9] : memref<384x128xf32, #tpu.memory_space<vmem>>, vector<384x128xf32>
    %cst_10 = arith.constant dense<0.000000e+00> : vector<16x128xf32>
    %14 = tpu.matmul %12, %13, %cst_10 {dimension_numbers = #tpu.dot_dimension_numbers<[1], [0], [0], [1], [0, 0, 1, 1], [], []>} : vector<16x384xf32>, vector<384x128xf32>, vector<16x128xf32> -> vector<16x128xf32>
    %c0_11 = arith.constant 0 : index
    %c0_12 = arith.constant 0 : index
    %15 = vector.load %arg5[%c0_11, %c0_12] : memref<1x128xf32, #tpu.memory_space<vmem>>, vector<1x128xf32>
    %16 = vector.broadcast %15 : vector<1x128xf32> to vector<16x128xf32>
    %17 = arith.addf %14, %16 : vector<16x128xf32>
    %c0_13 = arith.constant 0 : index
    %c0_14 = arith.constant 0 : index
    %18 = vector.load %arg6[%c0_13, %c0_14] : memref<16x128xf32, #tpu.memory_space<vmem>>, vector<16x128xf32>
    tpu.vector_store %arg6[%c0_13, %c0_14], %17 {strides = array<i32>} : memref<16x128xf32, #tpu.memory_space<vmem>>, vector<16x128xf32>,
    return
  }
  func.func @transform_0(%arg0: i32) -> (i32, i32) {
    %c0_i32 = arith.constant 0 : i32
    %c0_i32_0 = arith.constant 0 : i32
    return %arg0, %c0_i32 : i32, i32
  }
  func.func @transform_1(%arg0: i32) -> (i32, i32) {
    %c0_i32 = arith.constant 0 : i32
    %c0_i32_0 = arith.constant 0 : i32
    %c0_i32_1 = arith.constant 0 : i32
    return %c0_i32, %c0_i32_0 : i32, i32
  }
  func.func @transform_2(%arg0: i32) -> (i32, i32) {
    %c0_i32 = arith.constant 0 : i32
    %c0_i32_0 = arith.constant 0 : i32
    %c0_i32_1 = arith.constant 0 : i32
    return %c0_i32, %c0_i32_0 : i32, i32
  }
  func.func @transform_3(%arg0: i32) -> (i32, i32) {
    %c0_i32 = arith.constant 0 : i32
    %c0_i32_0 = arith.constant 0 : i32
    %c0_i32_1 = arith.constant 0 : i32
    return %c0_i32, %c0_i32_0 : i32, i32
  }
  func.func @transform_4(%arg0: i32) -> (i32, i32) {
    %c0_i32 = arith.constant 0 : i32
    %c0_i32_0 = arith.constant 0 : i32
    %c0_i32_1 = arith.constant 0 : i32
    return %c0_i32, %c0_i32_0 : i32, i32
  }
  func.func @transform_5(%arg0: i32) -> (i32, i32) {
    %c0_i32 = arith.constant 0 : i32
    %c0_i32_0 = arith.constant 0 : i32
    return %arg0, %c0_i32 : i32, i32
  }
}

</mosaic_0001>

<llo_original>
// kernel: feed_forward_nn.1
$region0: #{feed_forward_nn.1}
  #allocation0 [shape = 'u32[]', space=smem, size = 0x4, offset = 0x4, fixed_abs, tag = 'smem constant byte address 0x4 - core index']
  #allocation1 [shape = 'u32[144,128]{1,0:T(1,128)}', space=vmem, size = 0x12000, scoped, tag = 'internal scratch']
  %s0 = inlined_call_operand.vmem [shape: f32[32,128], index: 0, kind: input, shape index: {}]
  %s1 = inlined_call_operand.vmem [shape: f32[128,384], index: 1, kind: input, shape index: {}]
  %s2 = inlined_call_operand.vmem [shape: f32[1,384], index: 2, kind: input, shape index: {}]
  %s3 = inlined_call_operand.vmem [shape: f32[384,128], index: 3, kind: input, shape index: {}]
  %s4 = inlined_call_operand.vmem [shape: f32[1,128], index: 4, kind: input, shape index: {}]
  %s5 = inlined_call_operand.vmem [shape: f32[32,128], index: 5, kind: output, shape index: {}]
  %s6 = sld [smem:[#allocation0]]
  $region53: #{feed_forward_nn.1} parent=0
    _
  %s8 = ssub.s32 1, %s6
  %s9 = scalar_select 0, %s8, %s6
  loop: start=0, step=1, limit=4
  $region2: #{feed_forward_nn.1} parent=0 // loop_pre_header
    _
  $region3: #{feed_forward_nn.1} parent=0 // loop_header
    %s11 = sphi 0, %s15
    %p12 = scmp.ge.s32.totalorder %s11, 4
    %s21 = sphi 0, %s23
    %s24 = sphi 0, %s21
    %s25 = sphi 0, %s24
    %s41 = sphi 0, %s25
    %s45 = sphi 0, %s45
    %s47 = sphi 0, %s45
    %s48 = sphi 0, %s47
    %s62 = sphi 0, %s48
    %s66 = sphi 0, %s66
    %s68 = sphi 0, %s66
    %s69 = sphi 0, %s68
    %s83 = sphi 0, %s69
    %s87 = sphi 0, %s87
    %s89 = sphi 0, %s87
    %s90 = sphi 0, %s89
    %s104 = sphi 0, %s90
    %s108 = sphi 0, %s108
    %s110 = sphi 0, %s108
    %s111 = sphi 0, %s110
    %s125 = sphi 0, %s111
    %s131 = sphi 0, %s133
    %s134 = sphi 0, %s131
    %s135 = sphi 0, %s134
    %s151 = sphi 0, %s135
  $region4: #{feed_forward_nn.1} parent=0 // loop_header_branch
    %14 = sbr.rel (%p12) target = $region8
  $region5: #{feed_forward_nn.1} parent=0 // loop_body
    %s16 = ssub.s32 %s11, 1
    %s17 = ssub.s32 %s11, 2
    %s18 = sadd.s32 %s11, 1
    %s19 = ssub.s32 %s11, %s18
    %p20 = scmp.eq.s32.totalorder %s19, 0
    %s22 = sadd.s32 %s21, 1
    %s23 = scalar_select %p20, %s21, %s22
    %p26 = pneg %p20
    %p27 = scmp.eq.s32.totalorder %s11, 1
    %p28 = por %p26, %p27
    %p29 = scmp.ne.s32.totalorder %s21, %s24
    %p30 = scmp.eq.s32.totalorder %s11, 0
    %p31 = por %p29, %p30
    %p32 = scmp.ne.s32.totalorder %s21, %s24
    %p33 = scmp.eq.s32.totalorder %s16, 1
    %p34 = por %p32, %p33
    %p35 = scmp.ne.s32.totalorder %s24, %s25
    %p36 = scmp.eq.s32.totalorder %s16, 0
    %p37 = por %p35, %p36
    %p38 = scmp.ne.s32.totalorder %s24, %s25
    %p39 = scmp.eq.s32.totalorder %s17, 1
    %p40 = por %p38, %p39
    %p42 = scmp.ne.s32.totalorder %s25, %s41
    %p43 = scmp.eq.s32.totalorder %s17, 0
    %p44 = por %p42, %p43
    %s46 = sadd.s32 %s45, 1
    %p49 = scmp.eq.s32.totalorder %s11, 1
    %p50 = scmp.ne.s32.totalorder %s45, %s47
    %p51 = scmp.eq.s32.totalorder %s11, 0
    %p52 = por %p50, %p51
    %p53 = scmp.ne.s32.totalorder %s45, %s47
    %p54 = scmp.eq.s32.totalorder %s16, 1
    %p55 = por %p53, %p54
    %p56 = scmp.ne.s32.totalorder %s47, %s48
    %p57 = scmp.eq.s32.totalorder %s16, 0
    %p58 = por %p56, %p57
    %p59 = scmp.ne.s32.totalorder %s47, %s48
    %p60 = scmp.eq.s32.totalorder %s17, 1
    %p61 = por %p59, %p60
    %p63 = scmp.ne.s32.totalorder %s48, %s62
    %p64 = scmp.eq.s32.totalorder %s17, 0
    %p65 = por %p63, %p64
    %s67 = sadd.s32 %s66, 1
    %p70 = scmp.eq.s32.totalorder %s11, 1
    %p71 = scmp.ne.s32.totalorder %s66, %s68
    %p72 = scmp.eq.s32.totalorder %s11, 0
    %p73 = por %p71, %p72
    %p74 = scmp.ne.s32.totalorder %s66, %s68
    %p75 = scmp.eq.s32.totalorder %s16, 1
    %p76 = por %p74, %p75
    %p77 = scmp.ne.s32.totalorder %s68, %s69
    %p78 = scmp.eq.s32.totalorder %s16, 0
    %p79 = por %p77, %p78
    %p80 = scmp.ne.s32.totalorder %s68, %s69
    %p81 = scmp.eq.s32.totalorder %s17, 1
    %p82 = por %p80, %p81
    %p84 = scmp.ne.s32.totalorder %s69, %s83
    %p85 = scmp.eq.s32.totalorder %s17, 0
    %p86 = por %p84, %p85
    %s88 = sadd.s32 %s87, 1
    %p91 = scmp.eq.s32.totalorder %s11, 1
    %p92 = scmp.ne.s32.totalorder %s87, %s89
    %p93 = scmp.eq.s32.totalorder %s11, 0
    %p94 = por %p92, %p93
    %p95 = scmp.ne.s32.totalorder %s87, %s89
    %p96 = scmp.eq.s32.totalorder %s16, 1
    %p97 = por %p95, %p96
    %p98 = scmp.ne.s32.totalorder %s89, %s90
    %p99 = scmp.eq.s32.totalorder %s16, 0
    %p100 = por %p98, %p99
    %p101 = scmp.ne.s32.totalorder %s89, %s90
    %p102 = scmp.eq.s32.totalorder %s17, 1
    %p103 = por %p101, %p102
    %p105 = scmp.ne.s32.totalorder %s90, %s104
    %p106 = scmp.eq.s32.totalorder %s17, 0
    %p107 = por %p105, %p106
    %s109 = sadd.s32 %s108, 1
    %p112 = scmp.eq.s32.totalorder %s11, 1
    %p113 = scmp.ne.s32.totalorder %s108, %s110
    %p114 = scmp.eq.s32.totalorder %s11, 0
    %p115 = por %p113, %p114
    %p116 = scmp.ne.s32.totalorder %s108, %s110
    %p117 = scmp.eq.s32.totalorder %s16, 1
    %p118 = por %p116, %p117
    %p119 = scmp.ne.s32.totalorder %s110, %s111
    %p120 = scmp.eq.s32.totalorder %s16, 0
    %p121 = por %p119, %p120
    %p122 = scmp.ne.s32.totalorder %s110, %s111
    %p123 = scmp.eq.s32.totalorder %s17, 1
    %p124 = por %p122, %p123
    %p126 = scmp.ne.s32.totalorder %s111, %s125
    %p127 = scmp.eq.s32.totalorder %s17, 0
    %p128 = por %p126, %p127
    %s129 = ssub.s32 %s11, %s18
    %p130 = scmp.eq.s32.totalorder %s129, 0
    %s132 = sadd.s32 %s131, 1
    %s133 = scalar_select %p130, %s131, %s132
    %p136 = pneg %p130
    %p137 = scmp.eq.s32.totalorder %s11, 1
    %p138 = por %p136, %p137
    %p139 = scmp.ne.s32.totalorder %s131, %s134
    %p140 = scmp.eq.s32.totalorder %s11, 0
    %p141 = por %p139, %p140
    %p142 = scmp.ne.s32.totalorder %s131, %s134
    %p143 = scmp.eq.s32.totalorder %s16, 1
    %p144 = por %p142, %p143
    %p145 = scmp.ne.s32.totalorder %s134, %s135
    %p146 = scmp.eq.s32.totalorder %s16, 0
    %p147 = por %p145, %p146
    %p148 = scmp.ne.s32.totalorder %s134, %s135
    %p149 = scmp.eq.s32.totalorder %s17, 1
    %p150 = por %p148, %p149
    %p152 = scmp.ne.s32.totalorder %s135, %s151
    %p153 = scmp.eq.s32.totalorder %s17, 0
    %p154 = por %p152, %p153
    %p155 = scmp.le.s32.totalorder 1, %s11
    %p156 = scmp.lt.s32.totalorder %s11, 3
    %p157 = pnand %p155, %p156
    %p158 = pneg %p157
    // Predicated region
    $region9: #{feed_forward_nn.1} parent=5 // pred_check
      _
    $region10: #{feed_forward_nn.1} parent=5 // pred_check_branch
      %160 = sbr.rel (%p157) target = $region12
    $region11: #{feed_forward_nn.1} parent=5 // pred_region
      %s161 = ssub.s32 %s11, 1
      // Predicated region
      $region13: #{feed_forward_nn.1} parent=11 // pred_check
        %p162 = pneg %p58
      $region14: #{feed_forward_nn.1} parent=11 // pred_check_branch
        %164 = sbr.rel (%p162) target = $region16
      $region15: #{feed_forward_nn.1} parent=11 // pred_region
        _
      $region16: #{feed_forward_nn.1} parent=11 // pred_fallthru
        _
      // Predicated region
      $region17: #{feed_forward_nn.1} parent=11 // pred_check
        %p165 = pneg %p79
      $region18: #{feed_forward_nn.1} parent=11 // pred_check_branch
        %167 = sbr.rel (%p165) target = $region20
      $region19: #{feed_forward_nn.1} parent=11 // pred_region
        _
      $region20: #{feed_forward_nn.1} parent=11 // pred_fallthru
        _
      // Predicated region
      $region21: #{feed_forward_nn.1} parent=11 // pred_check
        %p168 = pneg %p100
      $region22: #{feed_forward_nn.1} parent=11 // pred_check_branch
        %170 = sbr.rel (%p168) target = $region24
      $region23: #{feed_forward_nn.1} parent=11 // pred_region
        _
      $region24: #{feed_forward_nn.1} parent=11 // pred_fallthru
        _
      // Predicated region
      $region25: #{feed_forward_nn.1} parent=11 // pred_check
        %p171 = pneg %p121
      $region26: #{feed_forward_nn.1} parent=11 // pred_check_branch
        %173 = sbr.rel (%p171) target = $region28
      $region27: #{feed_forward_nn.1} parent=11 // pred_region
        _
      $region28: #{feed_forward_nn.1} parent=11 // pred_fallthru
        _
    $region12: #{feed_forward_nn.1} parent=5 // pred_fallthru
      _
    %p174 = scmp.lt.s32.totalorder %s11, 2
    // Predicated region
    $region29: #{feed_forward_nn.1} parent=5 // pred_check
      %p175 = pneg %p174
    $region30: #{feed_forward_nn.1} parent=5 // pred_check_branch
      %177 = sbr.rel (%p175) target = $region32
    $region31: #{feed_forward_nn.1} parent=5 // pred_region
      // Predicated region
      $region33: #{feed_forward_nn.1} parent=31 // pred_check
        %p178 = pneg %p31
      $region34: #{feed_forward_nn.1} parent=31 // pred_check_branch
        %180 = sbr.rel (%p178) target = $region36
      $region35: #{feed_forward_nn.1} parent=31 // pred_region
        %s181 = smul.u32 2, %s11
        %p182 = scmp.lt.s32.totalorder %s181, 3
        %s183 = scalar_select %p182, %s181, 3
        %s184 = smul.addr %s183, 8
        %s185 = scalar_lea.vmem %s0, %s184
        %s186 = smul.u32 2, %s11
      $region36: #{feed_forward_nn.1} parent=31 // pred_fallthru
        _
    $region32: #{feed_forward_nn.1} parent=5 // pred_fallthru
      _
    %p187 = scmp.le.s32.totalorder 1, %s11
    %p188 = scmp.lt.s32.totalorder %s11, 3
    %p189 = pnand %p187, %p188
    %p190 = pneg %p189
    // Predicated region
    $region37: #{feed_forward_nn.1} parent=5 // pred_check
      _
    $region38: #{feed_forward_nn.1} parent=5 // pred_check_branch
      %192 = sbr.rel (%p189) target = $region40
    $region39: #{feed_forward_nn.1} parent=5 // pred_region
      %s193 = ssub.s32 %s11, 1
      %s194 = smul.u32 2, %s16
      %p195 = scmp.lt.s32.totalorder %s194, 3
      %s196 = scalar_select %p195, %s194, 3
      %s197 = smul.addr %s196, 8
      %s198 = scalar_lea.vmem %s0, %s197
      %p199 = pneg %p37
      %p200 = pneg %p34
      %p201 = pneg %p58
      %p202 = pneg %p55
      %p203 = pneg %p79
      %p204 = pneg %p76
      %p205 = pneg %p100
      %p206 = pneg %p97
      %p207 = pneg %p121
      %p208 = pneg %p118
      %p209 = pneg %p147
      %p210 = pneg %p144
      %s211 = smul.u32 2, %s16
      %p212 = scmp.lt.s32.totalorder %s211, 3
      %s213 = scalar_select %p212, %s211, 3
      %s214 = smul.addr %s213, 8
      %s215 = scalar_lea.vmem %s5, %s214
      %s216 = smul.u32 2, %s16
      %p217 = scmp.lt.s32.totalorder %s216, 3
      %s218 = scalar_select %p217, %s216, 3
      %s219 = smul.addr %s218, 8
      %s220 = scalar_lea.vmem %s0, %s219
      %s221 = smul.u32 2, %s16
      %s222 = smul.u32 2, %s16
      %p223 = scmp.lt.s32.totalorder %s222, 3
      %s224 = scalar_select %p223, %s222, 3
      %s225 = smul.addr %s224, 8
      %s226 = scalar_lea.vmem %s5, %s225
      %s227 = smul.u32 2, %s16
      %v228 = vld [vmem:[%s220] sm:$0xff]
      %v229 = vld [vmem:[%s220 + $0x8] sm:$0xff]
      %v230 = vld [vmem:[%s1] sm:$0xff]
      %v231 = vld [vmem:[%s1 + $0x8] sm:$0xff]
      %v232 = vld [vmem:[%s1 + $0x10] sm:$0xff]
      %v233 = vld [vmem:[%s1 + $0x18] sm:$0xff]
      %v234 = vld [vmem:[%s1 + $0x20] sm:$0xff]
      %v235 = vld [vmem:[%s1 + $0x28] sm:$0xff]
      %v236 = vld [vmem:[%s1 + $0x30] sm:$0xff]
      %v237 = vld [vmem:[%s1 + $0x38] sm:$0xff]
      %v238 = vld [vmem:[%s1 + $0x40] sm:$0xff]
      %v239 = vld [vmem:[%s1 + $0x48] sm:$0xff]
      %v240 = vld [vmem:[%s1 + $0x50] sm:$0xff]
      %v241 = vld [vmem:[%s1 + $0x58] sm:$0xff]
      %v242 = vld [vmem:[%s1 + $0x60] sm:$0xff]
      %v243 = vld [vmem:[%s1 + $0x68] sm:$0xff]
      %v244 = vld [vmem:[%s1 + $0x70] sm:$0xff]
      %v245 = vld [vmem:[%s1 + $0x78] sm:$0xff]
      %v246 = vld [vmem:[%s1 + $0x80] sm:$0xff]
      %v247 = vld [vmem:[%s1 + $0x88] sm:$0xff]
      %v248 = vld [vmem:[%s1 + $0x90] sm:$0xff]
      %v249 = vld [vmem:[%s1 + $0x98] sm:$0xff]
      %v250 = vld [vmem:[%s1 + $0xa0] sm:$0xff]
      %v251 = vld [vmem:[%s1 + $0xa8] sm:$0xff]
      %v252 = vld [vmem:[%s1 + $0xb0] sm:$0xff]
      %v253 = vld [vmem:[%s1 + $0xb8] sm:$0xff]
      %v254 = vld [vmem:[%s1 + $0xc0] sm:$0xff]
      %v255 = vld [vmem:[%s1 + $0xc8] sm:$0xff]
      %v256 = vld [vmem:[%s1 + $0xd0] sm:$0xff]
      %v257 = vld [vmem:[%s1 + $0xd8] sm:$0xff]
      %v258 = vld [vmem:[%s1 + $0xe0] sm:$0xff]
      %v259 = vld [vmem:[%s1 + $0xe8] sm:$0xff]
      %v260 = vld [vmem:[%s1 + $0xf0] sm:$0xff]
      %v261 = vld [vmem:[%s1 + $0xf8] sm:$0xff]
      %v262 = vld [vmem:[%s1 + $0x100] sm:$0xff]
      %v263 = vld [vmem:[%s1 + $0x108] sm:$0xff]
      %v264 = vld [vmem:[%s1 + $0x110] sm:$0xff]
      %v265 = vld [vmem:[%s1 + $0x118] sm:$0xff]
      %v266 = vld [vmem:[%s1 + $0x120] sm:$0xff]
      %v267 = vld [vmem:[%s1 + $0x128] sm:$0xff]
      %v268 = vld [vmem:[%s1 + $0x130] sm:$0xff]
      %v269 = vld [vmem:[%s1 + $0x138] sm:$0xff]
      %v270 = vld [vmem:[%s1 + $0x140] sm:$0xff]
      %v271 = vld [vmem:[%s1 + $0x148] sm:$0xff]
      %v272 = vld [vmem:[%s1 + $0x150] sm:$0xff]
      %v273 = vld [vmem:[%s1 + $0x158] sm:$0xff]
      %v274 = vld [vmem:[%s1 + $0x160] sm:$0xff]
      %v275 = vld [vmem:[%s1 + $0x168] sm:$0xff]
      %v276 = vld [vmem:[%s1 + $0x170] sm:$0xff]
      %v277 = vld [vmem:[%s1 + $0x178] sm:$0xff]
      %v278 = vld [vmem:[%s2] sm:$0x7]
      %v280 = vlaneseq
      %v281 = vshrl.u32 %v280, 7
      %v282 = vsub.s32 0, %v281
      %v283 = vrot.slane %v278, %v282
      %v284 = vlaneseq
      %v285 = vshrl.u32 %v284, 7
      %v286 = vsub.s32 1, %v285
      %v287 = vrot.slane %v278, %v286
      %v288 = vlaneseq
      %v289 = vshrl.u32 %v288, 7
      %v290 = vsub.s32 2, %v289
      %v291 = vrot.slane %v278, %v290
      %295 = vmatprep.subr.mxu0 %v276
      %296 = vmatpush1.msra.mxu0 %v275
      %297 = vmatprep.subr.mxu0 %v273
      %298 = vmatpush1.msra.mxu0 %v272
      %299 = vmatprep.subr.mxu0 %v270
      %300 = vmatpush1.msra.mxu0 %v269
      %301 = vmatprep.subr.mxu0 %v267
      %302 = vmatpush1.msra.mxu0 %v266
      %303 = vmatprep.subr.mxu0 %v264
      %304 = vmatpush1.msra.mxu0 %v263
      %305 = vmatprep.subr.mxu0 %v261
      %306 = vmatpush1.msra.mxu0 %v260
      %307 = vmatprep.subr.mxu0 %v258
      %308 = vmatpush1.msra.mxu0 %v257
      %309 = vmatprep.subr.mxu0 %v255
      %310 = vmatpush1.msra.mxu0 %v254
      %311 = vmatprep.subr.mxu0 %v252
      %312 = vmatpush1.msra.mxu0 %v251
      %313 = vmatprep.subr.mxu0 %v249
      %314 = vmatpush1.msra.mxu0 %v248
      %315 = vmatprep.subr.mxu0 %v246
      %316 = vmatpush1.msra.mxu0 %v245
      %317 = vmatprep.subr.mxu0 %v243
      %318 = vmatpush1.msra.mxu0 %v242
      %319 = vmatprep.subr.mxu0 %v240
      %320 = vmatpush1.msra.mxu0 %v239
      %321 = vmatprep.subr.mxu0 %v237
      %322 = vmatpush1.msra.mxu0 %v236
      %323 = vmatprep.subr.mxu0 %v234
      %324 = vmatpush1.msra.mxu0 %v233
      %325 = vmatprep.subr.mxu0 %v231
      %326 = vmatpush1.msra.mxu0 %v230
      %327 = vmatprep.subr.mxu0 0.0
      %328 = vmatpush2.msra.mxu0 0.0
      %329 = vmatprep.subr.mxu0 0.0
      %330 = vmatpush2.msra.mxu0 0.0
      %331 = vmatprep.subr.mxu0 0.0
      %332 = vmatpush2.msra.mxu0 0.0
      %333 = vmatprep.subr.mxu0 0.0
      %334 = vmatpush2.msra.mxu0 0.0
      %335 = vmatprep.subr.mxu0 0.0
      %336 = vmatpush2.msra.mxu0 0.0
      %337 = vmatprep.subr.mxu0 0.0
      %338 = vmatpush2.msra.mxu0 0.0
      %339 = vmatprep.subr.mxu0 0.0
      %340 = vmatpush2.msra.mxu0 0.0
      %341 = vmatprep.subr.mxu0 0.0
      %342 = vmatpush2.msra.mxu0 0.0
      %343 = vmatprep.subr.mxu0 0.0
      %344 = vmatpush2.msra.mxu0 0.0
      %345 = vmatprep.subr.mxu0 0.0
      %346 = vmatpush2.msra.mxu0 0.0
      %347 = vmatprep.subr.mxu0 0.0
      %348 = vmatpush2.msra.mxu0 0.0
      %349 = vmatprep.subr.mxu0 0.0
      %350 = vmatpush2.msra.mxu0 0.0
      %351 = vmatprep.subr.mxu0 0.0
      %352 = vmatpush2.msra.mxu0 0.0
      %353 = vmatprep.subr.mxu0 0.0
      %354 = vmatpush2.msra.mxu0 0.0
      %355 = vmatprep.subr.mxu0 0.0
      %356 = vmatpush2.msra.mxu0 0.0
      %357 = vmatprep.subr.mxu0 0.0
      %358 = vmatpush2.msra.mxu0 0.0
      %359 = vmatprep.mubr.f32.mxu0 0.0
      %360 = vmatmul.mubr.f32.gmra.mxu0 %v228
      %v361 = vpop.f32.mrf.mxu0
      %v362 = vadd.f32 %v283, %v361
      %v363 = vpop.f32.mrf.mxu0
      %v364 = vadd.f32 %v287, %v363
      %365 = vmatprep.mubr.f32.mxu0 0.0
      %366 = vmatmul.mubr.f32.gmra.mxu0 %v229
      %v367 = vpop.f32.mrf.mxu0
      %v368 = vadd.f32 %v283, %v367
      %v369 = vpop.f32.mrf.mxu0
      %v370 = vadd.f32 %v287, %v369
      %371 = vdwg.mxu0
      %372 = vmatprep.subr.mxu0 0.0
      %373 = vmatpush1.msra.mxu0 %v277
      %374 = vmatprep.subr.mxu0 0.0
      %375 = vmatpush1.msra.mxu0 %v274
      %376 = vmatprep.subr.mxu0 0.0
      %377 = vmatpush1.msra.mxu0 %v271
      %378 = vmatprep.subr.mxu0 0.0
      %379 = vmatpush1.msra.mxu0 %v268
      %380 = vmatprep.subr.mxu0 0.0
      %381 = vmatpush1.msra.mxu0 %v265
      %382 = vmatprep.subr.mxu0 0.0
      %383 = vmatpush1.msra.mxu0 %v262
      %384 = vmatprep.subr.mxu0 0.0
      %385 = vmatpush1.msra.mxu0 %v259
      %386 = vmatprep.subr.mxu0 0.0
      %387 = vmatpush1.msra.mxu0 %v256
      %388 = vmatprep.subr.mxu0 0.0
      %389 = vmatpush1.msra.mxu0 %v253
      %390 = vmatprep.subr.mxu0 0.0
      %391 = vmatpush1.msra.mxu0 %v250
      %392 = vmatprep.subr.mxu0 0.0
      %393 = vmatpush1.msra.mxu0 %v247
      %394 = vmatprep.subr.mxu0 0.0
      %395 = vmatpush1.msra.mxu0 %v244
      %396 = vmatprep.subr.mxu0 0.0
      %397 = vmatpush1.msra.mxu0 %v241
      %398 = vmatprep.subr.mxu0 0.0
      %399 = vmatpush1.msra.mxu0 %v238
      %400 = vmatprep.subr.mxu0 0.0
      %401 = vmatpush1.msra.mxu0 %v235
      %402 = vmatprep.subr.mxu0 0.0
      %403 = vmatpush1.msra.mxu0 %v232
      %404 = vmatprep.subr.mxu0 0.0
      %405 = vmatpush2.msra.mxu0 0.0
      %406 = vmatprep.subr.mxu0 0.0
      %407 = vmatpush2.msra.mxu0 0.0
      %408 = vmatprep.subr.mxu0 0.0
      %409 = vmatpush2.msra.mxu0 0.0
      %410 = vmatprep.subr.mxu0 0.0
      %411 = vmatpush2.msra.mxu0 0.0
      %412 = vmatprep.subr.mxu0 0.0
      %413 = vmatpush2.msra.mxu0 0.0
      %414 = vmatprep.subr.mxu0 0.0
      %415 = vmatpush2.msra.mxu0 0.0
      %416 = vmatprep.subr.mxu0 0.0
      %417 = vmatpush2.msra.mxu0 0.0
      %418 = vmatprep.subr.mxu0 0.0
      %419 = vmatpush2.msra.mxu0 0.0
      %420 = vmatprep.subr.mxu0 0.0
      %421 = vmatpush2.msra.mxu0 0.0
      %422 = vmatprep.subr.mxu0 0.0
      %423 = vmatpush2.msra.mxu0 0.0
      %424 = vmatprep.subr.mxu0 0.0
      %425 = vmatpush2.msra.mxu0 0.0
      %426 = vmatprep.subr.mxu0 0.0
      %427 = vmatpush2.msra.mxu0 0.0
      %428 = vmatprep.subr.mxu0 0.0
      %429 = vmatpush2.msra.mxu0 0.0
      %430 = vmatprep.subr.mxu0 0.0
      %431 = vmatpush2.msra.mxu0 0.0
      %432 = vmatprep.subr.mxu0 0.0
      %433 = vmatpush2.msra.mxu0 0.0
      %434 = vmatprep.subr.mxu0 0.0
      %435 = vmatpush2.msra.mxu0 0.0
      %436 = vmatprep.mubr.f32.mxu0 0.0
      %437 = vmatmul.mubr.f32.gmra.mxu0 %v228
      %v438 = vpop.f32.mrf.mxu0
      %v439 = vadd.f32 %v291, %v438
      %v440 = vpop.f32.mrf.mxu0
      %441 = vmatprep.mubr.f32.mxu0 0.0
      %442 = vmatmul.mubr.f32.gmra.mxu0 %v229
      %v443 = vpop.f32.mrf.mxu0
      %v444 = vadd.f32 %v291, %v443
      %v445 = vpop.f32.mrf.mxu0
      %446 = vdwg.mxu0
      %v447 = vmul.f32 %v362, 0.5
      %v448 = vmul.f32 %v364, 0.5
      %v449 = vmul.f32 %v439, 0.5
      %v450 = vmul.f32 %v368, 0.5
      %v451 = vmul.f32 %v370, 0.5
      %v452 = vmul.f32 %v444, 0.5
      %v453 = vtanh.pop %v447
      %v454 = vtanh.pop %v448
      %v455 = vtanh.pop %v449
      %v456 = vtanh.pop %v450
      %v457 = vtanh.pop %v451
      %v458 = vtanh.pop %v452
      %v459 = vadd.f32 %v453, 1.0
      %v460 = vadd.f32 %v454, 1.0
      %v461 = vadd.f32 %v455, 1.0
      %v462 = vadd.f32 %v456, 1.0
      %v463 = vadd.f32 %v457, 1.0
      %v464 = vadd.f32 %v458, 1.0
      %v465 = vmul.f32 %v459, 0.5
      %v466 = vmul.f32 %v460, 0.5
      %v467 = vmul.f32 %v461, 0.5
      %v468 = vmul.f32 %v462, 0.5
      %v469 = vmul.f32 %v463, 0.5
      %v470 = vmul.f32 %v464, 0.5
      %v471 = vld [vmem:[%s3] sm:$0xff]
      %v472 = vld [vmem:[%s3 + $0x8] sm:$0xff]
      %v473 = vld [vmem:[%s3 + $0x10] sm:$0xff]
      %v474 = vld [vmem:[%s3 + $0x18] sm:$0xff]
      %v475 = vld [vmem:[%s3 + $0x20] sm:$0xff]
      %v476 = vld [vmem:[%s3 + $0x28] sm:$0xff]
      %v477 = vld [vmem:[%s3 + $0x30] sm:$0xff]
      %v478 = vld [vmem:[%s3 + $0x38] sm:$0xff]
      %v479 = vld [vmem:[%s3 + $0x40] sm:$0xff]
      %v480 = vld [vmem:[%s3 + $0x48] sm:$0xff]
      %v481 = vld [vmem:[%s3 + $0x50] sm:$0xff]
      %v482 = vld [vmem:[%s3 + $0x58] sm:$0xff]
      %v483 = vld [vmem:[%s3 + $0x60] sm:$0xff]
      %v484 = vld [vmem:[%s3 + $0x68] sm:$0xff]
      %v485 = vld [vmem:[%s3 + $0x70] sm:$0xff]
      %v486 = vld [vmem:[%s3 + $0x78] sm:$0xff]
      %v487 = vld [vmem:[%s3 + $0x80] sm:$0xff]
      %v488 = vld [vmem:[%s3 + $0x88] sm:$0xff]
      %v489 = vld [vmem:[%s3 + $0x90] sm:$0xff]
      %v490 = vld [vmem:[%s3 + $0x98] sm:$0xff]
      %v491 = vld [vmem:[%s3 + $0xa0] sm:$0xff]
      %v492 = vld [vmem:[%s3 + $0xa8] sm:$0xff]
      %v493 = vld [vmem:[%s3 + $0xb0] sm:$0xff]
      %v494 = vld [vmem:[%s3 + $0xb8] sm:$0xff]
      %v495 = vld [vmem:[%s3 + $0xc0] sm:$0xff]
      %v496 = vld [vmem:[%s3 + $0xc8] sm:$0xff]
      %v497 = vld [vmem:[%s3 + $0xd0] sm:$0xff]
      %v498 = vld [vmem:[%s3 + $0xd8] sm:$0xff]
      %v499 = vld [vmem:[%s3 + $0xe0] sm:$0xff]
      %v500 = vld [vmem:[%s3 + $0xe8] sm:$0xff]
      %v501 = vld [vmem:[%s3 + $0xf0] sm:$0xff]
      %v502 = vld [vmem:[%s3 + $0xf8] sm:$0xff]
      %v503 = vld [vmem:[%s3 + $0x100] sm:$0xff]
      %v504 = vld [vmem:[%s3 + $0x108] sm:$0xff]
      %v505 = vld [vmem:[%s3 + $0x110] sm:$0xff]
      %v506 = vld [vmem:[%s3 + $0x118] sm:$0xff]
      %v507 = vld [vmem:[%s3 + $0x120] sm:$0xff]
      %v508 = vld [vmem:[%s3 + $0x128] sm:$0xff]
      %v509 = vld [vmem:[%s3 + $0x130] sm:$0xff]
      %v510 = vld [vmem:[%s3 + $0x138] sm:$0xff]
      %v511 = vld [vmem:[%s3 + $0x140] sm:$0xff]
      %v512 = vld [vmem:[%s3 + $0x148] sm:$0xff]
      %v513 = vld [vmem:[%s3 + $0x150] sm:$0xff]
      %v514 = vld [vmem:[%s3 + $0x158] sm:$0xff]
      %v515 = vld [vmem:[%s3 + $0x160] sm:$0xff]
      %v516 = vld [vmem:[%s3 + $0x168] sm:$0xff]
      %v517 = vld [vmem:[%s3 + $0x170] sm:$0xff]
      %v518 = vld [vmem:[%s3 + $0x178] sm:$0xff]
      %v519 = vld [vmem:[%s4] sm:$0x1]
      %v521 = vlaneseq
      %v522 = vshrl.u32 %v521, 7
      %v523 = vsub.s32 0, %v522
      %v524 = vrot.slane %v519, %v523
      %526 = vmatprep.subr.mxu0 0.0
      %527 = vmatpush1.msra.mxu0 %v486
      %528 = vmatprep.subr.mxu0 0.0
      %529 = vmatpush1.msra.mxu0 %v485
      %530 = vmatprep.subr.mxu0 0.0
      %531 = vmatpush1.msra.mxu0 %v484
      %532 = vmatprep.subr.mxu0 0.0
      %533 = vmatpush1.msra.mxu0 %v483
      %534 = vmatprep.subr.mxu0 0.0
      %535 = vmatpush1.msra.mxu0 %v482
      %536 = vmatprep.subr.mxu0 0.0
      %537 = vmatpush1.msra.mxu0 %v481
      %538 = vmatprep.subr.mxu0 0.0
      %539 = vmatpush1.msra.mxu0 %v480
      %540 = vmatprep.subr.mxu0 0.0
      %541 = vmatpush1.msra.mxu0 %v479
      %542 = vmatprep.subr.mxu0 0.0
      %543 = vmatpush1.msra.mxu0 %v478
      %544 = vmatprep.subr.mxu0 0.0
      %545 = vmatpush1.msra.mxu0 %v477
      %546 = vmatprep.subr.mxu0 0.0
      %547 = vmatpush1.msra.mxu0 %v476
      %548 = vmatprep.subr.mxu0 0.0
      %549 = vmatpush1.msra.mxu0 %v475
      %550 = vmatprep.subr.mxu0 0.0
      %551 = vmatpush1.msra.mxu0 %v474
      %552 = vmatprep.subr.mxu0 0.0
      %553 = vmatpush1.msra.mxu0 %v473
      %554 = vmatprep.subr.mxu0 0.0
      %555 = vmatpush1.msra.mxu0 %v472
      %556 = vmatprep.subr.mxu0 0.0
      %557 = vmatpush1.msra.mxu0 %v471
      %558 = vmatprep.subr.mxu0 0.0
      %559 = vmatpush2.msra.mxu0 %v502
      %560 = vmatprep.subr.mxu0 0.0
      %561 = vmatpush2.msra.mxu0 %v501
      %562 = vmatprep.subr.mxu0 0.0
      %563 = vmatpush2.msra.mxu0 %v500
      %564 = vmatprep.subr.mxu0 0.0
      %565 = vmatpush2.msra.mxu0 %v499
      %566 = vmatprep.subr.mxu0 0.0
      %567 = vmatpush2.msra.mxu0 %v498
      %568 = vmatprep.subr.mxu0 0.0
      %569 = vmatpush2.msra.mxu0 %v497
      %570 = vmatprep.subr.mxu0 0.0
      %571 = vmatpush2.msra.mxu0 %v496
      %572 = vmatprep.subr.mxu0 0.0
      %573 = vmatpush2.msra.mxu0 %v495
      %574 = vmatprep.subr.mxu0 0.0
      %575 = vmatpush2.msra.mxu0 %v494
      %576 = vmatprep.subr.mxu0 0.0
      %577 = vmatpush2.msra.mxu0 %v493
      %578 = vmatprep.subr.mxu0 0.0
      %579 = vmatpush2.msra.mxu0 %v492
      %580 = vmatprep.subr.mxu0 0.0
      %581 = vmatpush2.msra.mxu0 %v491
      %582 = vmatprep.subr.mxu0 0.0
      %583 = vmatpush2.msra.mxu0 %v490
      %584 = vmatprep.subr.mxu0 0.0
      %585 = vmatpush2.msra.mxu0 %v489
      %586 = vmatprep.subr.mxu0 0.0
      %587 = vmatpush2.msra.mxu0 %v488
      %588 = vmatprep.subr.mxu0 0.0
      %589 = vmatpush2.msra.mxu0 %v487
      %590 = vmatprep.mubr.f32.mxu0 %v466
      %591 = vmatmul.mubr.f32.gmra.mxu0 %v465
      %v592 = vpop.f32.mrf.mxu0
      %v593 = vadd.f32 %v524, %v592
      %v594 = vpop.f32.mrf.mxu0
      %595 = vmatprep.mubr.f32.mxu0 %v469
      %596 = vmatmul.mubr.f32.gmra.mxu0 %v468
      %v597 = vpop.f32.mrf.mxu0
      %v598 = vadd.f32 %v524, %v597
      %v599 = vpop.f32.mrf.mxu0
      %600 = vdwg.mxu0
      %601 = vmatprep.subr.mxu0 0.0
      %602 = vmatpush1.msra.mxu0 %v518
      %603 = vmatprep.subr.mxu0 0.0
      %604 = vmatpush1.msra.mxu0 %v517
      %605 = vmatprep.subr.mxu0 0.0
      %606 = vmatpush1.msra.mxu0 %v516
      %607 = vmatprep.subr.mxu0 0.0
      %608 = vmatpush1.msra.mxu0 %v515
      %609 = vmatprep.subr.mxu0 0.0
      %610 = vmatpush1.msra.mxu0 %v514
      %611 = vmatprep.subr.mxu0 0.0
      %612 = vmatpush1.msra.mxu0 %v513
      %613 = vmatprep.subr.mxu0 0.0
      %614 = vmatpush1.msra.mxu0 %v512
      %615 = vmatprep.subr.mxu0 0.0
      %616 = vmatpush1.msra.mxu0 %v511
      %617 = vmatprep.subr.mxu0 0.0
      %618 = vmatpush1.msra.mxu0 %v510
      %619 = vmatprep.subr.mxu0 0.0
      %620 = vmatpush1.msra.mxu0 %v509
      %621 = vmatprep.subr.mxu0 0.0
      %622 = vmatpush1.msra.mxu0 %v508
      %623 = vmatprep.subr.mxu0 0.0
      %624 = vmatpush1.msra.mxu0 %v507
      %625 = vmatprep.subr.mxu0 0.0
      %626 = vmatpush1.msra.mxu0 %v506
      %627 = vmatprep.subr.mxu0 0.0
      %628 = vmatpush1.msra.mxu0 %v505
      %629 = vmatprep.subr.mxu0 0.0
      %630 = vmatpush1.msra.mxu0 %v504
      %631 = vmatprep.subr.mxu0 0.0
      %632 = vmatpush1.msra.mxu0 %v503
      %633 = vmatprep.subr.mxu0 0.0
      %634 = vmatpush2.msra.mxu0 0.0
      %635 = vmatprep.subr.mxu0 0.0
      %636 = vmatpush2.msra.mxu0 0.0
      %637 = vmatprep.subr.mxu0 0.0
      %638 = vmatpush2.msra.mxu0 0.0
      %639 = vmatprep.subr.mxu0 0.0
      %640 = vmatpush2.msra.mxu0 0.0
      %641 = vmatprep.subr.mxu0 0.0
      %642 = vmatpush2.msra.mxu0 0.0
      %643 = vmatprep.subr.mxu0 0.0
      %644 = vmatpush2.msra.mxu0 0.0
      %645 = vmatprep.subr.mxu0 0.0
      %646 = vmatpush2.msra.mxu0 0.0
      %647 = vmatprep.subr.mxu0 0.0
      %648 = vmatpush2.msra.mxu0 0.0
      %649 = vmatprep.subr.mxu0 0.0
      %650 = vmatpush2.msra.mxu0 0.0
      %651 = vmatprep.subr.mxu0 0.0
      %652 = vmatpush2.msra.mxu0 0.0
      %653 = vmatprep.subr.mxu0 0.0
      %654 = vmatpush2.msra.mxu0 0.0
      %655 = vmatprep.subr.mxu0 0.0
      %656 = vmatpush2.msra.mxu0 0.0
      %657 = vmatprep.subr.mxu0 0.0
      %658 = vmatpush2.msra.mxu0 0.0
      %659 = vmatprep.subr.mxu0 0.0
      %660 = vmatpush2.msra.mxu0 0.0
      %661 = vmatprep.subr.mxu0 0.0
      %662 = vmatpush2.msra.mxu0 0.0
      %663 = vmatprep.subr.mxu0 0.0
      %664 = vmatpush2.msra.mxu0 0.0
      %665 = vmatprep.mubr.f32.mxu0 0.0
      %666 = vmatmul.mubr.f32.gmra.mxu0 %v467
      %v667 = vpop.f32.mrf.mxu0
      %v668 = vadd.f32 %v593, %v667
      %v669 = vpop.f32.mrf.mxu0
      %670 = vmatprep.mubr.f32.mxu0 0.0
      %671 = vmatmul.mubr.f32.gmra.mxu0 %v470
      %v672 = vpop.f32.mrf.mxu0
      %v673 = vadd.f32 %v598, %v672
      %v674 = vpop.f32.mrf.mxu0
      %675 = vdwg.mxu0
      %676 = vst [vmem:[%s226] sm:$0xff] %v668
      %677 = vst [vmem:[%s226 + $0x8] sm:$0xff] %v673
      %s678 = smul.u32 2, %s16
      %p679 = scmp.lt.s32.totalorder %s678, 3
      %s680 = scalar_select %p679, %s678, 3
      %s681 = smul.addr %s680, 8
      %s682 = scalar_lea.vmem %s5, %s681
      // Predicated region
      $region41: #{feed_forward_nn.1} parent=39 // pred_check
        %p683 = pneg %p144
      $region42: #{feed_forward_nn.1} parent=39 // pred_check_branch
        %685 = sbr.rel (%p683) target = $region44
      $region43: #{feed_forward_nn.1} parent=39 // pred_region
        %s686 = smul.u32 2, %s16
      $region44: #{feed_forward_nn.1} parent=39 // pred_fallthru
        _
    $region40: #{feed_forward_nn.1} parent=5 // pred_fallthru
      _
    %p687 = scmp.le.s32.totalorder 2, %s11
    // Predicated region
    $region45: #{feed_forward_nn.1} parent=5 // pred_check
      %p688 = pneg %p687
    $region46: #{feed_forward_nn.1} parent=5 // pred_check_branch
      %690 = sbr.rel (%p688) target = $region48
    $region47: #{feed_forward_nn.1} parent=5 // pred_region
      %s691 = ssub.s32 %s11, 2
      // Predicated region
      $region49: #{feed_forward_nn.1} parent=47 // pred_check
        %p692 = pneg %p150
      $region50: #{feed_forward_nn.1} parent=47 // pred_check_branch
        %694 = sbr.rel (%p692) target = $region52
      $region51: #{feed_forward_nn.1} parent=47 // pred_region
        %s695 = smul.u32 2, %s17
        %p696 = scmp.lt.s32.totalorder %s695, 3
        %s697 = scalar_select %p696, %s695, 3
        %s698 = smul.addr %s697, 8
        %s699 = scalar_lea.vmem %s5, %s698
      $region52: #{feed_forward_nn.1} parent=47 // pred_fallthru
        _
    $region48: #{feed_forward_nn.1} parent=5 // pred_fallthru
      _
  $region6: #{feed_forward_nn.1} parent=0 // loop_footer
    %s15 = sadd.s32 1, %s11
  $region7: #{feed_forward_nn.1} parent=0 // loop_footer_branch
    %10 = sbr.rel target = $region3
  $region8: #{feed_forward_nn.1} parent=0 // loop_exit
    _

</llo_original>
